<compile_context>
chip_gen: v7x
topology: tpu7x:2x2x1
jax: 0.10.0
libtpu: 0.0.40
codegen_flags: <defaults>
</compile_context>

<pallas_src>
import functools

import numpy as np
import jax
import jax.numpy as jnp
from jax.experimental import pallas as pl
from jax.experimental.pallas import tpu as pltpu

NUM_CLASSES = 31
LABEL_SMOOTHING = 0.1


def _class_weights():
    """Deterministic class weights, exactly as in MultiTaskLoss.__init__."""
    class_counts = {0: 100989, 1: 4934, 2: 5696, 3: 24954, 4: 40660, 5: 15147,
                    6: 14634, 7: 18900, 8: 2567, 9: 1972, 10: 28, 11: 7628,
                    12: 3684, 13: 21, 14: 11357, 15: 4365, 16: 155, 17: 407,
                    18: 1253, 19: 3230, 20: 117, 21: 3023, 22: 2672, 23: 6980,
                    24: 799, 25: 4670, 26: 13207, 27: 32826, 28: 1387,
                    29: 17681, 30: 912}
    alpha = 0.5
    counts = np.array(list(class_counts.values()), dtype=np.float32)
    w = 1.0 / np.power(counts, alpha)
    w /= w.sum()
    w *= len(class_counts)
    return jnp.asarray(w, dtype=jnp.float32)


def _round_up(x, m):
    return ((x + m - 1) // m) * m


def _pick_pixel_tile(hw, per_col_bytes, target, vmem_budget_bytes):
    """Largest multiple-of-128 pixel tile <= target that fits the VMEM budget."""
    hw_pad = _round_up(hw, 128)
    tile = min(hw_pad, _round_up(target, 128))
    cap = max(128, (vmem_budget_bytes // max(per_col_bytes, 1)) // 128 * 128)
    return max(128, min(tile, cap))


def _multitask_sums_kernel(recon_out_ref, recon_lab_ref, mask_ref,
                           logits_ref, clim_lab_ref, cls_w_ref,
                           out_ref,
                           acc_sq, acc_m, acc_nll, acc_sm, acc_wy,
                           *, hw, tile_p, npb_inner, needs_mask):
    p = pl.program_id(2)
    n_p = pl.num_programs(2)

    @pl.when(p == 0)
    def _init():
        acc_sq[...] = jnp.zeros_like(acc_sq)
        acc_m[...] = jnp.zeros_like(acc_m)
        acc_nll[...] = jnp.zeros_like(acc_nll)
        acc_sm[...] = jnp.zeros_like(acc_sm)
        acc_wy[...] = jnp.zeros_like(acc_wy)

    # static tail mask (only emitted when HW is not a multiple of tile_p)
    if needs_mask:
        g = pl.program_id(1) * npb_inner + p
        col = g * tile_p + jax.lax.broadcasted_iota(jnp.int32, (1, tile_p), 1)
        valid = col < hw                                  # (1, P) bool
    else:
        valid = None

    # ---- reconstruction: masked squared error, vector accumulators (VPU) ----
    x = recon_out_ref[0].astype(jnp.float32)              # (C, P)
    y = recon_lab_ref[0].astype(jnp.float32)              # (C, P)
    m = mask_ref[0].astype(jnp.float32)                   # (Cm, P), Cm in {1, C}
    d = x - y
    sq = d * d * m                                        # broadcasts if Cm == 1
    if needs_mask:
        sq = jnp.where(valid, sq, 0.0)
        m = jnp.where(valid, m, 0.0)
    acc_sq[...] += sq
    acc_m[...] += m

    # ---- climate: weighted label-smoothed CE, factored (no logp tensor) ----
    logits = logits_ref[0].astype(jnp.float32)            # (K, P), classes on sublanes
    w = cls_w_ref[...].astype(jnp.float32)                # (K, 1)
    mx = jnp.max(logits, axis=0, keepdims=True)           # (1, P)
    xs = logits - mx                                       # (K, P)
    logz = jnp.log(jnp.sum(jnp.exp(xs), axis=0, keepdims=True))   # (1, P)
    labels = clim_lab_ref[0]                               # (1, P) int32
    onehot = jax.lax.broadcasted_iota(jnp.int32, xs.shape, 0) == labels   # (K,P) bool
    x_y = jnp.sum(jnp.where(onehot, xs, 0.0), axis=0, keepdims=True)      # xs[y]
    w_y = jnp.sum(jnp.where(onehot, w, 0.0), axis=0, keepdims=True)       # w[y]
    wx = jnp.sum(w * xs, axis=0, keepdims=True)                            # sum_c w_c*xs_c
    w_sum = jnp.sum(w)                                     # scalar, tiny
    nll = w_y * (logz - x_y)                               # w[y] * (-logp[y])
    sm = w_sum * logz - wx                                 # sum_c w_c * (-logp_c)
    if needs_mask:
        nll = jnp.where(valid, nll, 0.0)
        sm = jnp.where(valid, sm, 0.0)
        w_y = jnp.where(valid, w_y, 0.0)
    acc_nll[...] += nll
    acc_sm[...] += sm
    acc_wy[...] += w_y

    # ---- finalize: collapse to partial sums on the last pixel block ----
    @pl.when(p == n_p - 1)
    def _finalize():
        s_sq = jnp.sum(acc_sq[...])
        s_m = jnp.sum(acc_m[...])
        s_nll = jnp.sum(acc_nll[...])
        s_sm = jnp.sum(acc_sm[...])
        s_wy = jnp.sum(acc_wy[...])
        row = jax.lax.broadcasted_iota(jnp.int32, (8, 128), 0)
        tile = jnp.where(row == 0, s_sq, 0.0)
        tile = tile + jnp.where(row == 1, s_m, 0.0)
        tile = tile + jnp.where(row == 2, s_nll, 0.0)
        tile = tile + jnp.where(row == 3, s_sm, 0.0)
        tile = tile + jnp.where(row == 4, s_wy, 0.0)
        out_ref[0, 0] = tile


def _multitask_partial_sums(recon_out3, recon_lab3, mask3, logits3, clim_lab3,
                            cls_w, *, pixel_tile_target=16384):
    B, C, HW = recon_out3.shape
    Cm = mask3.shape[1]
    K = logits3.shape[1]

    # pick a pixel tile from a VMEM budget (double-buffered inputs + scratch)
    per_col_in = (C * recon_out3.dtype.itemsize + C * recon_lab3.dtype.itemsize
                  + Cm * mask3.dtype.itemsize + K * logits3.dtype.itemsize
                  + clim_lab3.dtype.itemsize)
    per_col = 2 * per_col_in + (C + Cm + 3) * 4
    tile_p = _pick_pixel_tile(HW, per_col, pixel_tile_target,
                              vmem_budget_bytes=24 * 1024 * 1024)

    npb = -(-HW // tile_p)                      # cdiv
    nc = 2 if (npb % 2 == 0 and npb >= 2) else 1   # extra parallel axis (v7x, B==1)
    npb_inner = npb // nc
    needs_mask = (npb * tile_p != HW)

    kernel = functools.partial(_multitask_sums_kernel, hw=HW, tile_p=tile_p,
                               npb_inner=npb_inner, needs_mask=needs_mask)

    def pix_map(b, c, p):
        return (b, 0, c * npb_inner + p)

    grid_spec = pltpu.PrefetchScalarGridSpec(
        num_scalar_prefetch=0,
        grid=(B, nc, npb_inner),
        in_specs=[
            pl.BlockSpec((1, C, tile_p), pix_map),     # recon out
            pl.BlockSpec((1, C, tile_p), pix_map),     # recon label
            pl.BlockSpec((1, Cm, tile_p), pix_map),    # erased mask
            pl.BlockSpec((1, K, tile_p), pix_map),     # climate logits (NCHW)
            pl.BlockSpec((1, 1, tile_p), pix_map),     # climate labels
            pl.BlockSpec((K, 1), lambda b, c, p: (0, 0)),   # class weights
        ],
        out_specs=pl.BlockSpec((1, 1, 8, 128), lambda b, c, p: (b, c, 0, 0)),
        scratch_shapes=[
            pltpu.VMEM((C, tile_p), jnp.float32),      # acc_sq
            pltpu.VMEM((Cm, tile_p), jnp.float32),     # acc_m
            pltpu.VMEM((1, tile_p), jnp.float32),      # acc_nll
            pltpu.VMEM((1, tile_p), jnp.float32),      # acc_sm
            pltpu.VMEM((1, tile_p), jnp.float32),      # acc_wy
        ])

    nbytes_in = sum(int(a.size) * a.dtype.itemsize for a in
                    (recon_out3, recon_lab3, mask3, logits3, clim_lab3, cls_w))
    cost = pl.CostEstimate(
        flops=int(B * HW * (4 * C + 8 * K)),
        transcendentals=int(B * HW * (K + 1)),
        bytes_accessed=int(nbytes_in + B * nc * 8 * 128 * 4))

    partials = pl.pallas_call(
        kernel,
        out_shape=jax.ShapeDtypeStruct((B, nc, 8, 128), jnp.float32),
        grid_spec=grid_spec,
        compiler_params=pltpu.CompilerParams(
            dimension_semantics=("parallel", "parallel", "arbitrary"),
            vmem_limit_bytes=48 * 1024 * 1024),
        cost_estimate=cost,
    )(recon_out3, recon_lab3, mask3, logits3, clim_lab3, cls_w)

    return jnp.sum(partials, axis=(0, 1))      # (8, 128); tiny cross-core reduce


def multi_task_loss(output, labels, log_sigmas, class_weights,
                    *, pixel_tile_target=16384):
    """Forward pass of MultiTaskLoss (fixed_task=None, no zoom/tv/perceptual)."""
    recon_out = output['reconstruction']
    recon_lab = labels['reconstruction']
    B, C, H, W = recon_out.shape
    HW = H * W

    logits = output['climate']
    K = logits.shape[1]

    # layout-only reshapes (contiguous, no transposes, no dtype casts in HBM)
    recon_out3 = recon_out.reshape(B, C, HW)
    recon_lab3 = recon_lab.reshape(B, C, HW)
    mask = labels['erased_mask']
    if mask.ndim == 3:                          # (B, H, W)
        mask3 = mask.reshape(B, 1, HW)
    else:                                       # (B, 1 or C, H, W)
        mask3 = mask.reshape(B, mask.shape[1], HW)
    logits3 = logits.reshape(B, K, HW)
    clim_lab3 = labels['climate'].astype(jnp.int32).reshape(B, 1, HW)
    cls_w = class_weights.astype(jnp.float32).reshape(K, 1)

    sums = _multitask_partial_sums(recon_out3, recon_lab3, mask3, logits3,
                                   clim_lab3, cls_w,
                                   pixel_tile_target=pixel_tile_target)
    masked_sq = sums[0, 0]
    mask_sum = sums[1, 0]
    nll_sum = sums[2, 0]
    smooth_sum = sums[3, 0]
    wsum = sums[4, 0]

    # masked MSE reconstruction loss
    loss_recon = masked_sq / (mask_sum + 1e-8)

    # PyTorch CrossEntropyLoss(weight=w, label_smoothing=0.1) semantics:
    #   (1-eps) * [sum_i w[y_i]*(-logp_i[y_i])] / sum_i w[y_i]
    #   + (eps/K) * [sum_i sum_c w[c]*(-logp_i[c])] / sum_i w[y_i]
    nll = nll_sum / wsum
    smooth = smooth_sum / wsum
    loss_climate = (1.0 - LABEL_SMOOTHING) * nll + (LABEL_SMOOTHING / K) * smooth

    # plain MSE on coords — O(B*4), stays in plain JAX
    co = output['coords'].astype(jnp.float32)
    cl = labels['coords'].astype(jnp.float32)
    loss_geo = jnp.mean((co - cl) ** 2)

    # uncertainty weighting (log sigmas are (1,) parameters, clamped to [-3,3])
    ls_r = jnp.clip(log_sigmas['recon'], -3.0, 3.0)
    ls_c = jnp.clip(log_sigmas['clim'], -3.0, 3.0)
    ls_g = jnp.clip(log_sigmas['geo'], -3.0, 3.0)

    scaled_recon = 0.5 * jnp.exp(-2.0 * ls_r) * loss_recon   # scale_recon = 1.0
    scaled_clim = 0.5 * jnp.exp(-2.0 * ls_c) * loss_climate  # scale_seg = 1.0
    scaled_geo = 0.5 * jnp.exp(-2.0 * ls_g) * loss_geo       # scale_geo = 1.0
    loss = (scaled_recon + ls_r) + (scaled_clim + ls_c) + (scaled_geo + ls_g)

    # device scalars only (no host syncs) -> safe under jax.jit
    log_loss = {
        'total_loss': loss[0],
        'loss_components': {
            'reconstruction': loss_recon,
            'climate': loss_climate,
            'geolocation': loss_geo,
        },
        'log_sigmas': {
            'log_sigma_recon': ls_r[0],
            'log_sigma_clim': ls_c[0],
            'log_sigma_geo': ls_g[0],
        },
        'scaled_loss': {
            'reconstruction': scaled_recon[0],
            'climate': scaled_clim[0],
            'geolocation': scaled_geo[0],
        },
    }
    return loss, log_loss


def _reference_loss(output, labels, class_weights):
    """Pure-JAX reference with identical semantics (correctness check)."""
    x = output['reconstruction'].astype(jnp.float32)
    y = labels['reconstruction'].astype(jnp.float32)
    m = labels['erased_mask'].astype(jnp.float32)
    loss_recon = jnp.sum((x - y) ** 2 * m) / (jnp.sum(m) + 1e-8)

    logits = output['climate'].astype(jnp.float32)          # (B,K,H,W)
    K = logits.shape[1]
    logp = jax.nn.log_softmax(logits, axis=1)
    tgt = labels['climate'].astype(jnp.int32)                # (B,H,W)
    onehot = jax.nn.one_hot(tgt, K, axis=1)                  # (B,K,H,W)
    w = class_weights.reshape(1, K, 1, 1)
    w_y = jnp.sum(onehot * w, axis=1)
    nll = jnp.sum(onehot * (-logp) * w, axis=1)
    smooth = jnp.sum(w * (-logp), axis=1)
    denom = jnp.sum(w_y)
    loss_climate = ((1.0 - LABEL_SMOOTHING) * jnp.sum(nll) / denom
                    + (LABEL_SMOOTHING / K) * jnp.sum(smooth) / denom)

    loss_geo = jnp.mean((output['coords'] - labels['coords']) ** 2)
    total = 0.5 * loss_recon + 0.5 * loss_climate + 0.5 * loss_geo  # sigmas = 0
    return total


def _make_inputs(key, B, C, H, W, K, mask_channels):
    ks = jax.random.split(key, 8)
    recon_out = jax.random.normal(ks[0], (B, C, H, W), jnp.float32)
    recon_lab = jax.random.normal(ks[1], (B, C, H, W), jnp.float32)
    erased_mask = (jax.random.uniform(ks[2], (B, mask_channels, H, W)) > 0.5
                   ).astype(jnp.float32)
    climate_logits = jax.random.normal(ks[3], (B, K, H, W), jnp.float32)
    climate_labels = jax.random.randint(ks[4], (B, H, W), 0, K, jnp.int32)
    coords_out = jax.random.normal(ks[5], (B, 4), jnp.float32)
    coords_lab = jax.random.normal(ks[6], (B, 4), jnp.float32)
    output = {'reconstruction': recon_out, 'climate': climate_logits,
              'coords': coords_out}
    labels = {'reconstruction': recon_lab, 'erased_mask': erased_mask,
              'climate': climate_labels, 'coords': coords_lab}
    return output, labels


if __name__ == "__main__":
    key = jax.random.PRNGKey(0)
    K = NUM_CLASSES
    class_weights = _class_weights()
    # nn.Parameter(torch.zeros(1)) for each task's log-sigma
    log_sigmas = {'recon': jnp.zeros((1,), jnp.float32),
                  'clim': jnp.zeros((1,), jnp.float32),
                  'geo': jnp.zeros((1,), jnp.float32)}

    # ---- case 1: standard shapes, HW multiple of 128 (no tail masking) ----
    k1, k2 = jax.random.split(key)
    out1, lab1 = _make_inputs(k1, B=2, C=8, H=16, W=16, K=K, mask_channels=8)
    loss_fn1 = jax.jit(functools.partial(multi_task_loss,
                                         pixel_tile_target=16384))
    loss1, _ = loss_fn1(out1, lab1, log_sigmas, class_weights)
    loss1 = jax.block_until_ready(loss1)
    ref1 = jax.block_until_ready(_reference_loss(out1, lab1, class_weights))
    np.testing.assert_allclose(np.asarray(loss1)[0], np.asarray(ref1),
                               rtol=1e-4, atol=1e-5)

    # ---- case 2: B=1, ragged HW (tail masking), chunked pixel axis,
    #              1-channel erased mask broadcast in-kernel ----
    out2, lab2 = _make_inputs(k2, B=1, C=8, H=30, W=31, K=K, mask_channels=1)
    loss_fn2 = jax.jit(functools.partial(multi_task_loss,
                                         pixel_tile_target=128))
    loss2, _ = loss_fn2(out2, lab2, log_sigmas, class_weights)
    loss2 = jax.block_until_ready(loss2)
    ref2 = jax.block_until_ready(_reference_loss(out2, lab2, class_weights))
    np.testing.assert_allclose(np.asarray(loss2)[0], np.asarray(ref2),
                               rtol=1e-4, atol=1e-5)

    # TODO(synk): PerceptualLoss (pretrained VGG16), zoom MSE and TV loss are
    # disabled by the default flags (perceptual_loss=False, apply_zoom=False,
    # climate_segm=False) and are not implemented as Pallas kernels.
    print("KERNEL_OK")
</pallas_src>

<mosaic_0001>
module attributes {stable_mosaic.version = 11 : i64} {
  func.func @_multitask_sums_kernel(%arg0: i32, %arg1: i32, %arg2: i32, %arg3: memref<1x8x256xf32, #tpu.memory_space<vmem>>, %arg4: memref<1x8x256xf32, #tpu.memory_space<vmem>>, %arg5: memref<1x8x256xf32, #tpu.memory_space<vmem>>, %arg6: memref<1x31x256xf32, #tpu.memory_space<vmem>>, %arg7: memref<1x1x256xi32, #tpu.memory_space<vmem>>, %arg8: memref<31x1xf32, #tpu.memory_space<vmem>>, %arg9: memref<1x1x8x128xf32, #tpu.memory_space<vmem>>, %arg10: memref<8x256xf32, #tpu.memory_space<vmem>>, %arg11: memref<8x256xf32, #tpu.memory_space<vmem>>, %arg12: memref<1x256xf32, #tpu.memory_space<vmem>>, %arg13: memref<1x256xf32, #tpu.memory_space<vmem>>, %arg14: memref<1x256xf32, #tpu.memory_space<vmem>>) attributes {dimension_semantics = [#tpu.dimension_semantics<parallel>, #tpu.dimension_semantics<parallel>, #tpu.dimension_semantics<arbitrary>], iteration_bounds = array<i64: 2, 1, 1>, scalar_prefetch = 0 : i64, scratch_operands = 5 : i64, tpu.core_type = #tpu.core_type<tc>, window_params = [{transform_indices = @transform_0, window_bounds = array<i64: 1, 8, 256>}, {transform_indices = @transform_1, window_bounds = array<i64: 1, 8, 256>}, {transform_indices = @transform_2, window_bounds = array<i64: 1, 8, 256>}, {transform_indices = @transform_3, window_bounds = array<i64: 1, 31, 256>}, {transform_indices = @transform_4, window_bounds = array<i64: 1, 1, 256>}, {pipeline_mode = #tpu.pipeline_mode<synchronous>, transform_indices = @transform_5, window_bounds = array<i64: 31, 1>}, {transform_indices = @transform_6, window_bounds = array<i64: 1, 1, 8, 128>}]} {
    %c0_i32 = arith.constant 0 : i32
    %0 = arith.cmpi eq, %arg2, %c0_i32 : i32
    %1 = arith.extui %0 : i1 to i32
    %c0_i32_0 = arith.constant 0 : i32
    %2 = arith.cmpi ne, %1, %c0_i32_0 : i32
    scf.if %2 {
      %cst_46 = arith.constant 0.000000e+00 : f32
      %69 = vector.broadcast %cst_46 : f32 to vector<8x256xf32>
      %c0_47 = arith.constant 0 : index
      %c0_48 = arith.constant 0 : index
      %70 = vector.load %arg10[%c0_47, %c0_48] : memref<8x256xf32, #tpu.memory_space<vmem>>, vector<8x256xf32>
      tpu.vector_store %arg10[%c0_47, %c0_48], %69 {strides = array<i32>} : memref<8x256xf32, #tpu.memory_space<vmem>>, vector<8x256xf32>,
      %cst_49 = arith.constant 0.000000e+00 : f32
      %71 = vector.broadcast %cst_49 : f32 to vector<8x256xf32>
      %c0_50 = arith.constant 0 : index
      %c0_51 = arith.constant 0 : index
      %72 = vector.load %arg11[%c0_50, %c0_51] : memref<8x256xf32, #tpu.memory_space<vmem>>, vector<8x256xf32>
      tpu.vector_store %arg11[%c0_50, %c0_51], %71 {strides = array<i32>} : memref<8x256xf32, #tpu.memory_space<vmem>>, vector<8x256xf32>,
      %cst_52 = arith.constant 0.000000e+00 : f32
      %73 = vector.broadcast %cst_52 : f32 to vector<1x256xf32>
      %c0_53 = arith.constant 0 : index
      %c0_54 = arith.constant 0 : index
      %74 = vector.load %arg12[%c0_53, %c0_54] : memref<1x256xf32, #tpu.memory_space<vmem>>, vector<1x256xf32>
      tpu.vector_store %arg12[%c0_53, %c0_54], %73 {strides = array<i32>} : memref<1x256xf32, #tpu.memory_space<vmem>>, vector<1x256xf32>,
      %cst_55 = arith.constant 0.000000e+00 : f32
      %75 = vector.broadcast %cst_55 : f32 to vector<1x256xf32>
      %c0_56 = arith.constant 0 : index
      %c0_57 = arith.constant 0 : index
      %76 = vector.load %arg13[%c0_56, %c0_57] : memref<1x256xf32, #tpu.memory_space<vmem>>, vector<1x256xf32>
      tpu.vector_store %arg13[%c0_56, %c0_57], %75 {strides = array<i32>} : memref<1x256xf32, #tpu.memory_space<vmem>>, vector<1x256xf32>,
      %cst_58 = arith.constant 0.000000e+00 : f32
      %77 = vector.broadcast %cst_58 : f32 to vector<1x256xf32>
      %c0_59 = arith.constant 0 : index
      %c0_60 = arith.constant 0 : index
      %78 = vector.load %arg14[%c0_59, %c0_60] : memref<1x256xf32, #tpu.memory_space<vmem>>, vector<1x256xf32>
      tpu.vector_store %arg14[%c0_59, %c0_60], %77 {strides = array<i32>} : memref<1x256xf32, #tpu.memory_space<vmem>>, vector<1x256xf32>,
    } else {
    }
    %c0 = arith.constant 0 : index
    %c0_1 = arith.constant 0 : index
    %c0_2 = arith.constant 0 : index
    %3 = vector.load %arg3[%c0, %c0_1, %c0_2] : memref<1x8x256xf32, #tpu.memory_space<vmem>>, vector<1x8x256xf32>
    %4 = vector.shape_cast %3 : vector<1x8x256xf32> to vector<8x256xf32>
    %c0_3 = arith.constant 0 : index
    %c0_4 = arith.constant 0 : index
    %c0_5 = arith.constant 0 : index
    %5 = vector.load %arg4[%c0_3, %c0_4, %c0_5] : memref<1x8x256xf32, #tpu.memory_space<vmem>>, vector<1x8x256xf32>
    %6 = vector.shape_cast %5 : vector<1x8x256xf32> to vector<8x256xf32>
    %c0_6 = arith.constant 0 : index
    %c0_7 = arith.constant 0 : index
    %c0_8 = arith.constant 0 : index
    %7 = vector.load %arg5[%c0_6, %c0_7, %c0_8] : memref<1x8x256xf32, #tpu.memory_space<vmem>>, vector<1x8x256xf32>
    %8 = vector.shape_cast %7 : vector<1x8x256xf32> to vector<8x256xf32>
    %9 = arith.subf %4, %6 : vector<8x256xf32>
    %10 = arith.mulf %9, %9 : vector<8x256xf32>
    %11 = arith.mulf %10, %8 : vector<8x256xf32>
    %c0_9 = arith.constant 0 : index
    %c0_10 = arith.constant 0 : index
    %12 = vector.load %arg10[%c0_9, %c0_10] : memref<8x256xf32, #tpu.memory_space<vmem>>, vector<8x256xf32>
    %13 = arith.addf %12, %11 : vector<8x256xf32>
    %c0_11 = arith.constant 0 : index
    %c0_12 = arith.constant 0 : index
    %14 = vector.load %arg10[%c0_11, %c0_12] : memref<8x256xf32, #tpu.memory_space<vmem>>, vector<8x256xf32>
    tpu.vector_store %arg10[%c0_11, %c0_12], %13 {strides = array<i32>} : memref<8x256xf32, #tpu.memory_space<vmem>>, vector<8x256xf32>,
    %c0_13 = arith.constant 0 : index
    %c0_14 = arith.constant 0 : index
    %15 = vector.load %arg11[%c0_13, %c0_14] : memref<8x256xf32, #tpu.memory_space<vmem>>, vector<8x256xf32>
    %16 = arith.addf %15, %8 : vector<8x256xf32>
    %c0_15 = arith.constant 0 : index
    %c0_16 = arith.constant 0 : index
    %17 = vector.load %arg11[%c0_15, %c0_16] : memref<8x256xf32, #tpu.memory_space<vmem>>, vector<8x256xf32>
    tpu.vector_store %arg11[%c0_15, %c0_16], %16 {strides = array<i32>} : memref<8x256xf32, #tpu.memory_space<vmem>>, vector<8x256xf32>,
    %c0_17 = arith.constant 0 : index
    %c0_18 = arith.constant 0 : index
    %c0_19 = arith.constant 0 : index
    %18 = vector.load %arg6[%c0_17, %c0_18, %c0_19] : memref<1x31x256xf32, #tpu.memory_space<vmem>>, vector<1x31x256xf32>
    %19 = vector.shape_cast %18 : vector<1x31x256xf32> to vector<31x256xf32>
    %c0_20 = arith.constant 0 : index
    %c0_21 = arith.constant 0 : index
    %20 = vector.load %arg8[%c0_20, %c0_21] : memref<31x1xf32, #tpu.memory_space<vmem>>, vector<31x1xf32>
    %cst = arith.constant dense<0xFF800000> : vector<256xf32>
    %21 = vector.multi_reduction <maximumf>, %19, %cst [0] : vector<31x256xf32> to vector<256xf32>
    %22 = vector.shape_cast %21 : vector<256xf32> to vector<1x256xf32>
    %23 = vector.broadcast %22 : vector<1x256xf32> to vector<31x256xf32>
    %24 = arith.subf %19, %23 : vector<31x256xf32>
    %25 = math.exp %24 : vector<31x256xf32>
    %cst_22 = arith.constant dense<0.000000e+00> : vector<256xf32>
    %26 = vector.multi_reduction <add>, %25, %cst_22 [0] : vector<31x256xf32> to vector<256xf32>
    %27 = vector.shape_cast %26 : vector<256xf32> to vector<1x256xf32>
    %28 = math.log %27 : vector<1x256xf32>
    %c0_23 = arith.constant 0 : index
    %c0_24 = arith.constant 0 : index
    %c0_25 = arith.constant 0 : index
    %29 = vector.load %arg7[%c0_23, %c0_24, %c0_25] : memref<1x1x256xi32, #tpu.memory_space<vmem>>, vector<1x1x256xi32>
    %30 = vector.shape_cast %29 : vector<1x1x256xi32> to vector<1x256xi32>
    %31 = tpu.iota {dimensions = array<i32: 0>} : vector<31x256xi32>
    %32 = vector.broadcast %30 : vector<1x256xi32> to vector<31x256xi32>
    %33 = arith.cmpi eq, %31, %32 : vector<31x256xi32>
    %cst_26 = arith.constant 0.000000e+00 : f32
    %34 = vector.broadcast %cst_26 : f32 to vector<31x256xf32>
    %35 = arith.select %33, %24, %34 : vector<31x256xi1>, vector<31x256xf32>
    %cst_27 = arith.constant dense<0.000000e+00> : vector<256xf32>
    %36 = vector.multi_reduction <add>, %35, %cst_27 [0] : vector<31x256xf32> to vector<256xf32>
    %37 = vector.shape_cast %36 : vector<256xf32> to vector<1x256xf32>
    %cst_28 = arith.constant 0.000000e+00 : f32
    %38 = vector.shape_cast %20 : vector<31x1xf32> to vector<31x1xf32>
    %39 = vector.broadcast %38 : vector<31x1xf32> to vector<31x256xf32>
    %40 = vector.broadcast %cst_28 : f32 to vector<31x256xf32>
    %41 = arith.select %33, %39, %40 : vector<31x256xi1>, vector<31x256xf32>
    %cst_29 = arith.constant dense<0.000000e+00> : vector<256xf32>
    %42 = vector.multi_reduction <add>, %41, %cst_29 [0] : vector<31x256xf32> to vector<256xf32>
    %43 = vector.shape_cast %42 : vector<256xf32> to vector<1x256xf32>
    %44 = vector.broadcast %20 : vector<31x1xf32> to vector<31x256xf32>
    %45 = arith.mulf %44, %24 : vector<31x256xf32>
    %cst_30 = arith.constant dense<0.000000e+00> : vector<256xf32>
    %46 = vector.multi_reduction <add>, %45, %cst_30 [0] : vector<31x256xf32> to vector<256xf32>
    %47 = vector.shape_cast %46 : vector<256xf32> to vector<1x256xf32>
    %48 = vector.shape_cast %20 : vector<31x1xf32> to vector<1x31x1xf32>
    %cst_31 = arith.constant dense<0.000000e+00> : vector<1xf32>
    %49 = vector.multi_reduction <add>, %48, %cst_31 [1, 2] : vector<1x31x1xf32> to vector<1xf32>
    %50 = vector.shape_cast %49 : vector<1xf32> to vector<1x1x1xf32>
    %51 = vector.extract %50[0, 0, 0] : f32 from vector<1x1x1xf32>
    %52 = arith.subf %28, %37 : vector<1x256xf32>
    %53 = arith.mulf %43, %52 : vector<1x256xf32>
    %54 = vector.broadcast %51 : f32 to vector<1x256xf32>
    %55 = arith.mulf %54, %28 : vector<1x256xf32>
    %56 = arith.subf %55, %47 : vector<1x256xf32>
    %c0_32 = arith.constant 0 : index
    %c0_33 = arith.constant 0 : index
    %57 = vector.load %arg12[%c0_32, %c0_33] : memref<1x256xf32, #tpu.memory_space<vmem>>, vector<1x256xf32>
    %58 = arith.addf %57, %53 : vector<1x256xf32>
    %c0_34 = arith.constant 0 : index
    %c0_35 = arith.constant 0 : index
    %59 = vector.load %arg12[%c0_34, %c0_35] : memref<1x256xf32, #tpu.memory_space<vmem>>, vector<1x256xf32>
    tpu.vector_store %arg12[%c0_34, %c0_35], %58 {strides = array<i32>} : memref<1x256xf32, #tpu.memory_space<vmem>>, vector<1x256xf32>,
    %c0_36 = arith.constant 0 : index
    %c0_37 = arith.constant 0 : index
    %60 = vector.load %arg13[%c0_36, %c0_37] : memref<1x256xf32, #tpu.memory_space<vmem>>, vector<1x256xf32>
    %61 = arith.addf %60, %56 : vector<1x256xf32>
    %c0_38 = arith.constant 0 : index
    %c0_39 = arith.constant 0 : index
    %62 = vector.load %arg13[%c0_38, %c0_39] : memref<1x256xf32, #tpu.memory_space<vmem>>, vector<1x256xf32>
    tpu.vector_store %arg13[%c0_38, %c0_39], %61 {strides = array<i32>} : memref<1x256xf32, #tpu.memory_space<vmem>>, vector<1x256xf32>,
    %c0_40 = arith.constant 0 : index
    %c0_41 = arith.constant 0 : index
    %63 = vector.load %arg14[%c0_40, %c0_41] : memref<1x256xf32, #tpu.memory_space<vmem>>, vector<1x256xf32>
    %64 = arith.addf %63, %43 : vector<1x256xf32>
    %c0_42 = arith.constant 0 : index
    %c0_43 = arith.constant 0 : index
    %65 = vector.load %arg14[%c0_42, %c0_43] : memref<1x256xf32, #tpu.memory_space<vmem>>, vector<1x256xf32>
    tpu.vector_store %arg14[%c0_42, %c0_43], %64 {strides = array<i32>} : memref<1x256xf32, #tpu.memory_space<vmem>>, vector<1x256xf32>,
    %c0_i32_44 = arith.constant 0 : i32
    %66 = arith.cmpi eq, %arg2, %c0_i32_44 : i32
    %67 = arith.extui %66 : i1 to i32
    %c0_i32_45 = arith.constant 0 : i32
    %68 = arith.cmpi ne, %67, %c0_i32_45 : i32
    scf.if %68 {
      %c0_46 = arith.constant 0 : index
      %c0_47 = arith.constant 0 : index
      %69 = vector.load %arg10[%c0_46, %c0_47] : memref<8x256xf32, #tpu.memory_space<vmem>>, vector<8x256xf32>
      %70 = vector.shape_cast %69 : vector<8x256xf32> to vector<1x8x256xf32>
      %cst_48 = arith.constant dense<0.000000e+00> : vector<1xf32>
      %71 = vector.multi_reduction <add>, %70, %cst_48 [1, 2] : vector<1x8x256xf32> to vector<1xf32>
      %72 = vector.shape_cast %71 : vector<1xf32> to vector<1x1x1xf32>
      %73 = vector.extract %72[0, 0, 0] : f32 from vector<1x1x1xf32>
      %c0_49 = arith.constant 0 : index
      %c0_50 = arith.constant 0 : index
      %74 = vector.load %arg11[%c0_49, %c0_50] : memref<8x256xf32, #tpu.memory_space<vmem>>, vector<8x256xf32>
      %75 = vector.shape_cast %74 : vector<8x256xf32> to vector<1x8x256xf32>
      %cst_51 = arith.constant dense<0.000000e+00> : vector<1xf32>
      %76 = vector.multi_reduction <add>, %75, %cst_51 [1, 2] : vector<1x8x256xf32> to vector<1xf32>
      %77 = vector.shape_cast %76 : vector<1xf32> to vector<1x1x1xf32>
      %78 = vector.extract %77[0, 0, 0] : f32 from vector<1x1x1xf32>
      %c0_52 = arith.constant 0 : index
      %c0_53 = arith.constant 0 : index
      %79 = vector.load %arg12[%c0_52, %c0_53] : memref<1x256xf32, #tpu.memory_space<vmem>>, vector<1x256xf32>
      %80 = vector.shape_cast %79 : vector<1x256xf32> to vector<1x1x256xf32>
      %cst_54 = arith.constant dense<0.000000e+00> : vector<1xf32>
      %81 = vector.multi_reduction <add>, %80, %cst_54 [1, 2] : vector<1x1x256xf32> to vector<1xf32>
      %82 = vector.shape_cast %81 : vector<1xf32> to vector<1x1x1xf32>
      %83 = vector.extract %82[0, 0, 0] : f32 from vector<1x1x1xf32>
      %c0_55 = arith.constant 0 : index
      %c0_56 = arith.constant 0 : index
      %84 = vector.load %arg13[%c0_55, %c0_56] : memref<1x256xf32, #tpu.memory_space<vmem>>, vector<1x256xf32>
      %85 = vector.shape_cast %84 : vector<1x256xf32> to vector<1x1x256xf32>
      %cst_57 = arith.constant dense<0.000000e+00> : vector<1xf32>
      %86 = vector.multi_reduction <add>, %85, %cst_57 [1, 2] : vector<1x1x256xf32> to vector<1xf32>
      %87 = vector.shape_cast %86 : vector<1xf32> to vector<1x1x1xf32>
      %88 = vector.extract %87[0, 0, 0] : f32 from vector<1x1x1xf32>
      %c0_58 = arith.constant 0 : index
      %c0_59 = arith.constant 0 : index
      %89 = vector.load %arg14[%c0_58, %c0_59] : memref<1x256xf32, #tpu.memory_space<vmem>>, vector<1x256xf32>
      %90 = vector.shape_cast %89 : vector<1x256xf32> to vector<1x1x256xf32>
      %cst_60 = arith.constant dense<0.000000e+00> : vector<1xf32>
      %91 = vector.multi_reduction <add>, %90, %cst_60 [1, 2] : vector<1x1x256xf32> to vector<1xf32>
      %92 = vector.shape_cast %91 : vector<1xf32> to vector<1x1x1xf32>
      %93 = vector.extract %92[0, 0, 0] : f32 from vector<1x1x1xf32>
      %94 = tpu.iota {dimensions = array<i32: 0>} : vector<8x128xi32>
      %c0_i32_61 = arith.constant 0 : i32
      %95 = vector.broadcast %c0_i32_61 : i32 to vector<8x128xi32>
      %96 = arith.cmpi eq, %94, %95 : vector<8x128xi32>
      %cst_62 = arith.constant 0.000000e+00 : f32
      %97 = vector.broadcast %73 : f32 to vector<8x128xf32>
      %98 = vector.broadcast %cst_62 : f32 to vector<8x128xf32>
      %99 = arith.select %96, %97, %98 : vector<8x128xi1>, vector<8x128xf32>
      %c1_i32 = arith.constant 1 : i32
      %100 = vector.broadcast %c1_i32 : i32 to vector<8x128xi32>
      %101 = arith.cmpi eq, %94, %100 : vector<8x128xi32>
      %cst_63 = arith.constant 0.000000e+00 : f32
      %102 = vector.broadcast %78 : f32 to vector<8x128xf32>
      %103 = vector.broadcast %cst_63 : f32 to vector<8x128xf32>
      %104 = arith.select %101, %102, %103 : vector<8x128xi1>, vector<8x128xf32>
      %105 = arith.addf %99, %104 : vector<8x128xf32>
      %c2_i32 = arith.constant 2 : i32
      %106 = vector.broadcast %c2_i32 : i32 to vector<8x128xi32>
      %107 = arith.cmpi eq, %94, %106 : vector<8x128xi32>
      %cst_64 = arith.constant 0.000000e+00 : f32
      %108 = vector.broadcast %83 : f32 to vector<8x128xf32>
      %109 = vector.broadcast %cst_64 : f32 to vector<8x128xf32>
      %110 = arith.select %107, %108, %109 : vector<8x128xi1>, vector<8x128xf32>
      %111 = arith.addf %105, %110 : vector<8x128xf32>
      %c3_i32 = arith.constant 3 : i32
      %112 = vector.broadcast %c3_i32 : i32 to vector<8x128xi32>
      %113 = arith.cmpi eq, %94, %112 : vector<8x128xi32>
      %cst_65 = arith.constant 0.000000e+00 : f32
      %114 = vector.broadcast %88 : f32 to vector<8x128xf32>
      %115 = vector.broadcast %cst_65 : f32 to vector<8x128xf32>
      %116 = arith.select %113, %114, %115 : vector<8x128xi1>, vector<8x128xf32>
      %117 = arith.addf %111, %116 : vector<8x128xf32>
      %c4_i32 = arith.constant 4 : i32
      %118 = vector.broadcast %c4_i32 : i32 to vector<8x128xi32>
      %119 = arith.cmpi eq, %94, %118 : vector<8x128xi32>
      %cst_66 = arith.constant 0.000000e+00 : f32
      %120 = vector.broadcast %93 : f32 to vector<8x128xf32>
      %121 = vector.broadcast %cst_66 : f32 to vector<8x128xf32>
      %122 = arith.select %119, %120, %121 : vector<8x128xi1>, vector<8x128xf32>
      %123 = arith.addf %117, %122 : vector<8x128xf32>
      %c0_67 = arith.constant 0 : index
      %c0_68 = arith.constant 0 : index
      %c0_69 = arith.constant 0 : index
      %c0_70 = arith.constant 0 : index
      %124 = vector.load %arg9[%c0_67, %c0_68, %c0_69, %c0_70] : memref<1x1x8x128xf32, #tpu.memory_space<vmem>>, vector<1x1x8x128xf32>
      %125 = vector.shape_cast %124 : vector<1x1x8x128xf32> to vector<8x128xf32>
      %126 = vector.shape_cast %123 : vector<8x128xf32> to vector<1x1x8x128xf32>
      tpu.vector_store %arg9[%c0_67, %c0_68, %c0_69, %c0_70], %126 {strides = array<i32>} : memref<1x1x8x128xf32, #tpu.memory_space<vmem>>, vector<1x1x8x128xf32>,
    } else {
    }
    return
  }
  func.func @transform_0(%arg0: i32, %arg1: i32, %arg2: i32) -> (i32, i32, i32) {
    %c1_i32 = arith.constant 1 : i32
    %0 = arith.muli %arg1, %c1_i32 : i32
    %1 = arith.addi %0, %arg2 : i32
    %c0_i32 = arith.constant 0 : i32
    %c0_i32_0 = arith.constant 0 : i32
    return %arg0, %c0_i32, %1 : i32, i32, i32
  }
  func.func @transform_1(%arg0: i32, %arg1: i32, %arg2: i32) -> (i32, i32, i32) {
    %c1_i32 = arith.constant 1 : i32
    %0 = arith.muli %arg1, %c1_i32 : i32
    %1 = arith.addi %0, %arg2 : i32
    %c0_i32 = arith.constant 0 : i32
    %c0_i32_0 = arith.constant 0 : i32
    return %arg0, %c0_i32, %1 : i32, i32, i32
  }
  func.func @transform_2(%arg0: i32, %arg1: i32, %arg2: i32) -> (i32, i32, i32) {
    %c1_i32 = arith.constant 1 : i32
    %0 = arith.muli %arg1, %c1_i32 : i32
    %1 = arith.addi %0, %arg2 : i32
    %c0_i32 = arith.constant 0 : i32
    %c0_i32_0 = arith.constant 0 : i32
    return %arg0, %c0_i32, %1 : i32, i32, i32
  }
  func.func @transform_3(%arg0: i32, %arg1: i32, %arg2: i32) -> (i32, i32, i32) {
    %c1_i32 = arith.constant 1 : i32
    %0 = arith.muli %arg1, %c1_i32 : i32
    %1 = arith.addi %0, %arg2 : i32
    %c0_i32 = arith.constant 0 : i32
    %c0_i32_0 = arith.constant 0 : i32
    return %arg0, %c0_i32, %1 : i32, i32, i32
  }
  func.func @transform_4(%arg0: i32, %arg1: i32, %arg2: i32) -> (i32, i32, i32) {
    %c1_i32 = arith.constant 1 : i32
    %0 = arith.muli %arg1, %c1_i32 : i32
    %1 = arith.addi %0, %arg2 : i32
    %c0_i32 = arith.constant 0 : i32
    %c0_i32_0 = arith.constant 0 : i32
    return %arg0, %c0_i32, %1 : i32, i32, i32
  }
  func.func @transform_5(%arg0: i32, %arg1: i32, %arg2: i32) -> (i32, i32) {
    %c0_i32 = arith.constant 0 : i32
    %c0_i32_0 = arith.constant 0 : i32
    %c0_i32_1 = arith.constant 0 : i32
    return %c0_i32, %c0_i32_0 : i32, i32
  }
  func.func @transform_6(%arg0: i32, %arg1: i32, %arg2: i32) -> (i32, i32, i32, i32) {
    %c0_i32 = arith.constant 0 : i32
    %c0_i32_0 = arith.constant 0 : i32
    %c0_i32_1 = arith.constant 0 : i32
    return %arg0, %arg1, %c0_i32, %c0_i32_0 : i32, i32, i32, i32
  }
}

</mosaic_0001>

<llo_original>
// kernel: multi_task_loss.1
$region0: #{multi_task_loss.1}
  #allocation0 [shape = 'u32[]', space=smem, size = 0x4, offset = 0x4, fixed_abs, tag = 'smem constant byte address 0x4 - core index']
  #allocation1 [shape = 'u32[144,128]{1,0:T(1,128)}', space=vmem, size = 0x12000, scoped, tag = 'internal scratch']
  #allocation2 [shape = 'f32[8,256]{1,0:T(8,128)}', space=vmem, size = 0x2000, scoped, tag = 'scratch operand']
  #allocation3 [shape = 'f32[8,256]{1,0:T(8,128)}', space=vmem, size = 0x2000, scoped, tag = 'scratch operand']
  #allocation4 [shape = 'f32[1,256]{1,0:T(1,128)}', space=vmem, size = 0x400, scoped, tag = 'scratch operand']
  #allocation5 [shape = 'f32[1,256]{1,0:T(1,128)}', space=vmem, size = 0x400, scoped, tag = 'scratch operand']
  #allocation6 [shape = 'f32[1,256]{1,0:T(1,128)}', space=vmem, size = 0x400, scoped, tag = 'scratch operand']
  %s0 = inlined_call_operand.vmem [shape: f32[2,8,256], index: 0, kind: input, shape index: {}]
  %s1 = inlined_call_operand.vmem [shape: f32[2,8,256], index: 1, kind: input, shape index: {}]
  %s2 = inlined_call_operand.vmem [shape: f32[2,8,256], index: 2, kind: input, shape index: {}]
  %s3 = inlined_call_operand.vmem [shape: f32[2,31,256], index: 3, kind: input, shape index: {}]
  %s4 = inlined_call_operand.vmem [shape: s32[2,1,256], index: 4, kind: input, shape index: {}]
  %s5 = inlined_call_operand.vmem [shape: f32[31,1], index: 5, kind: input, shape index: {}]
  %s6 = inlined_call_operand.vmem [shape: f32[2,1,8,128], index: 6, kind: output, shape index: {}]
  %s7 = sld [smem:[#allocation0]]
  $region65: #{multi_task_loss.1} parent=0
    _
  %s9 = ssub.s32 1, %s7
  %s10 = scalar_select 0, %s9, %s7
  loop: start=0, step=1, limit=4
  $region2: #{multi_task_loss.1} parent=0 // loop_pre_header
    _
  $region3: #{multi_task_loss.1} parent=0 // loop_header
    %s12 = sphi 0, %s16
    %p13 = scmp.ge.s32.totalorder %s12, 4
    %s19 = sphi 0, %s38
    %s20 = sphi 0, %s34
    %s21 = sphi 0, %s30
    %s22 = sphi 0, %s19
    %s23 = sphi 0, %s20
    %s24 = sphi 0, %s21
    %s25 = sphi 0, %s22
    %s26 = sphi 0, %s23
    %s27 = sphi 0, %s24
    %s45 = sphi 0, %s47
    %s48 = sphi 0, %s45
    %s49 = sphi 0, %s48
    %s65 = sphi 0, %s49
    %s75 = sphi 0, %s77
    %s78 = sphi 0, %s75
    %s79 = sphi 0, %s78
    %s95 = sphi 0, %s79
    %s105 = sphi 0, %s107
    %s108 = sphi 0, %s105
    %s109 = sphi 0, %s108
    %s125 = sphi 0, %s109
    %s135 = sphi 0, %s137
    %s138 = sphi 0, %s135
    %s139 = sphi 0, %s138
    %s155 = sphi 0, %s139
    %s165 = sphi 0, %s167
    %s168 = sphi 0, %s165
    %s169 = sphi 0, %s168
    %s185 = sphi 0, %s169
    %s189 = sphi 0, %s189
    %s191 = sphi 0, %s189
    %s192 = sphi 0, %s191
    %s206 = sphi 0, %s192
    %s214 = sphi 0, %s216
    %s217 = sphi 0, %s214
    %s218 = sphi 0, %s217
    %s234 = sphi 0, %s218
  $region4: #{multi_task_loss.1} parent=0 // loop_header_branch
    %15 = sbr.rel (%p13) target = $region8
  $region5: #{multi_task_loss.1} parent=0 // loop_body
    %s17 = ssub.s32 %s12, 1
    %s18 = ssub.s32 %s12, 2
    %s28 = sadd.s32 1, %s21
    %p29 = scmp.ge.s32.totalorder %s28, 1
    %s30 = scalar_select %p29, 0, %s28
    %s31 = sadd.s32 1, %s20
    %s32 = scalar_select %p29, %s31, %s20
    %p33 = scmp.ge.s32.totalorder %s32, 1
    %s34 = scalar_select %p33, 0, %s32
    %s35 = sadd.s32 1, %s19
    %s36 = scalar_select %p33, %s35, %s19
    %p37 = scmp.ge.s32.totalorder %s36, 2
    %s38 = scalar_select %p37, 0, %s36
    %s39 = sadd.s32 %s20, %s21
    %s40 = sadd.s32 %s34, %s30
    %s41 = ssub.s32 %s19, %s38
    %s42 = ssub.s32 %s39, %s40
    %s43 = sor.u32 %s41, %s42
    %p44 = scmp.eq.s32.totalorder %s43, 0
    %s46 = sadd.s32 %s45, 1
    %s47 = scalar_select %p44, %s45, %s46
    %p50 = pneg %p44
    %p51 = scmp.eq.s32.totalorder %s12, 1
    %p52 = por %p50, %p51
    %p53 = scmp.ne.s32.totalorder %s45, %s48
    %p54 = scmp.eq.s32.totalorder %s12, 0
    %p55 = por %p53, %p54
    %p56 = scmp.ne.s32.totalorder %s45, %s48
    %p57 = scmp.eq.s32.totalorder %s17, 1
    %p58 = por %p56, %p57
    %p59 = scmp.ne.s32.totalorder %s48, %s49
    %p60 = scmp.eq.s32.totalorder %s17, 0
    %p61 = por %p59, %p60
    %p62 = scmp.ne.s32.totalorder %s48, %s49
    %p63 = scmp.eq.s32.totalorder %s18, 1
    %p64 = por %p62, %p63
    %p66 = scmp.ne.s32.totalorder %s49, %s65
    %p67 = scmp.eq.s32.totalorder %s18, 0
    %p68 = por %p66, %p67
    %s69 = sadd.s32 %s20, %s21
    %s70 = sadd.s32 %s34, %s30
    %s71 = ssub.s32 %s19, %s38
    %s72 = ssub.s32 %s69, %s70
    %s73 = sor.u32 %s71, %s72
    %p74 = scmp.eq.s32.totalorder %s73, 0
    %s76 = sadd.s32 %s75, 1
    %s77 = scalar_select %p74, %s75, %s76
    %p80 = pneg %p74
    %p81 = scmp.eq.s32.totalorder %s12, 1
    %p82 = por %p80, %p81
    %p83 = scmp.ne.s32.totalorder %s75, %s78
    %p84 = scmp.eq.s32.totalorder %s12, 0
    %p85 = por %p83, %p84
    %p86 = scmp.ne.s32.totalorder %s75, %s78
    %p87 = scmp.eq.s32.totalorder %s17, 1
    %p88 = por %p86, %p87
    %p89 = scmp.ne.s32.totalorder %s78, %s79
    %p90 = scmp.eq.s32.totalorder %s17, 0
    %p91 = por %p89, %p90
    %p92 = scmp.ne.s32.totalorder %s78, %s79
    %p93 = scmp.eq.s32.totalorder %s18, 1
    %p94 = por %p92, %p93
    %p96 = scmp.ne.s32.totalorder %s79, %s95
    %p97 = scmp.eq.s32.totalorder %s18, 0
    %p98 = por %p96, %p97
    %s99 = sadd.s32 %s20, %s21
    %s100 = sadd.s32 %s34, %s30
    %s101 = ssub.s32 %s19, %s38
    %s102 = ssub.s32 %s99, %s100
    %s103 = sor.u32 %s101, %s102
    %p104 = scmp.eq.s32.totalorder %s103, 0
    %s106 = sadd.s32 %s105, 1
    %s107 = scalar_select %p104, %s105, %s106
    %p110 = pneg %p104
    %p111 = scmp.eq.s32.totalorder %s12, 1
    %p112 = por %p110, %p111
    %p113 = scmp.ne.s32.totalorder %s105, %s108
    %p114 = scmp.eq.s32.totalorder %s12, 0
    %p115 = por %p113, %p114
    %p116 = scmp.ne.s32.totalorder %s105, %s108
    %p117 = scmp.eq.s32.totalorder %s17, 1
    %p118 = por %p116, %p117
    %p119 = scmp.ne.s32.totalorder %s108, %s109
    %p120 = scmp.eq.s32.totalorder %s17, 0
    %p121 = por %p119, %p120
    %p122 = scmp.ne.s32.totalorder %s108, %s109
    %p123 = scmp.eq.s32.totalorder %s18, 1
    %p124 = por %p122, %p123
    %p126 = scmp.ne.s32.totalorder %s109, %s125
    %p127 = scmp.eq.s32.totalorder %s18, 0
    %p128 = por %p126, %p127
    %s129 = sadd.s32 %s20, %s21
    %s130 = sadd.s32 %s34, %s30
    %s131 = ssub.s32 %s19, %s38
    %s132 = ssub.s32 %s129, %s130
    %s133 = sor.u32 %s131, %s132
    %p134 = scmp.eq.s32.totalorder %s133, 0
    %s136 = sadd.s32 %s135, 1
    %s137 = scalar_select %p134, %s135, %s136
    %p140 = pneg %p134
    %p141 = scmp.eq.s32.totalorder %s12, 1
    %p142 = por %p140, %p141
    %p143 = scmp.ne.s32.totalorder %s135, %s138
    %p144 = scmp.eq.s32.totalorder %s12, 0
    %p145 = por %p143, %p144
    %p146 = scmp.ne.s32.totalorder %s135, %s138
    %p147 = scmp.eq.s32.totalorder %s17, 1
    %p148 = por %p146, %p147
    %p149 = scmp.ne.s32.totalorder %s138, %s139
    %p150 = scmp.eq.s32.totalorder %s17, 0
    %p151 = por %p149, %p150
    %p152 = scmp.ne.s32.totalorder %s138, %s139
    %p153 = scmp.eq.s32.totalorder %s18, 1
    %p154 = por %p152, %p153
    %p156 = scmp.ne.s32.totalorder %s139, %s155
    %p157 = scmp.eq.s32.totalorder %s18, 0
    %p158 = por %p156, %p157
    %s159 = sadd.s32 %s20, %s21
    %s160 = sadd.s32 %s34, %s30
    %s161 = ssub.s32 %s19, %s38
    %s162 = ssub.s32 %s159, %s160
    %s163 = sor.u32 %s161, %s162
    %p164 = scmp.eq.s32.totalorder %s163, 0
    %s166 = sadd.s32 %s165, 1
    %s167 = scalar_select %p164, %s165, %s166
    %p170 = pneg %p164
    %p171 = scmp.eq.s32.totalorder %s12, 1
    %p172 = por %p170, %p171
    %p173 = scmp.ne.s32.totalorder %s165, %s168
    %p174 = scmp.eq.s32.totalorder %s12, 0
    %p175 = por %p173, %p174
    %p176 = scmp.ne.s32.totalorder %s165, %s168
    %p177 = scmp.eq.s32.totalorder %s17, 1
    %p178 = por %p176, %p177
    %p179 = scmp.ne.s32.totalorder %s168, %s169
    %p180 = scmp.eq.s32.totalorder %s17, 0
    %p181 = por %p179, %p180
    %p182 = scmp.ne.s32.totalorder %s168, %s169
    %p183 = scmp.eq.s32.totalorder %s18, 1
    %p184 = por %p182, %p183
    %p186 = scmp.ne.s32.totalorder %s169, %s185
    %p187 = scmp.eq.s32.totalorder %s18, 0
    %p188 = por %p186, %p187
    %s190 = sadd.s32 %s189, 1
    %p193 = scmp.eq.s32.totalorder %s12, 1
    %p194 = scmp.ne.s32.totalorder %s189, %s191
    %p195 = scmp.eq.s32.totalorder %s12, 0
    %p196 = por %p194, %p195
    %p197 = scmp.ne.s32.totalorder %s189, %s191
    %p198 = scmp.eq.s32.totalorder %s17, 1
    %p199 = por %p197, %p198
    %p200 = scmp.ne.s32.totalorder %s191, %s192
    %p201 = scmp.eq.s32.totalorder %s17, 0
    %p202 = por %p200, %p201
    %p203 = scmp.ne.s32.totalorder %s191, %s192
    %p204 = scmp.eq.s32.totalorder %s18, 1
    %p205 = por %p203, %p204
    %p207 = scmp.ne.s32.totalorder %s192, %s206
    %p208 = scmp.eq.s32.totalorder %s18, 0
    %p209 = por %p207, %p208
    %s210 = ssub.s32 %s19, %s38
    %s211 = ssub.s32 %s20, %s34
    %s212 = sor.u32 %s210, %s211
    %p213 = scmp.eq.s32.totalorder %s212, 0
    %s215 = sadd.s32 %s214, 1
    %s216 = scalar_select %p213, %s214, %s215
    %p219 = pneg %p213
    %p220 = scmp.eq.s32.totalorder %s12, 1
    %p221 = por %p219, %p220
    %p222 = scmp.ne.s32.totalorder %s214, %s217
    %p223 = scmp.eq.s32.totalorder %s12, 0
    %p224 = por %p222, %p223
    %p225 = scmp.ne.s32.totalorder %s214, %s217
    %p226 = scmp.eq.s32.totalorder %s17, 1
    %p227 = por %p225, %p226
    %p228 = scmp.ne.s32.totalorder %s217, %s218
    %p229 = scmp.eq.s32.totalorder %s17, 0
    %p230 = por %p228, %p229
    %p231 = scmp.ne.s32.totalorder %s217, %s218
    %p232 = scmp.eq.s32.totalorder %s18, 1
    %p233 = por %p231, %p232
    %p235 = scmp.ne.s32.totalorder %s218, %s234
    %p236 = scmp.eq.s32.totalorder %s18, 0
    %p237 = por %p235, %p236
    %p238 = scmp.le.s32.totalorder 1, %s12
    %p239 = scmp.lt.s32.totalorder %s12, 3
    %p240 = pnand %p238, %p239
    %p241 = pneg %p240
    // Predicated region
    $region9: #{multi_task_loss.1} parent=5 // pred_check
      _
    $region10: #{multi_task_loss.1} parent=5 // pred_check_branch
      %243 = sbr.rel (%p240) target = $region12
    $region11: #{multi_task_loss.1} parent=5 // pred_region
      %s244 = ssub.s32 %s12, 1
      // Predicated region
      $region13: #{multi_task_loss.1} parent=11 // pred_check
        %p245 = pneg %p202
      $region14: #{multi_task_loss.1} parent=11 // pred_check_branch
        %247 = sbr.rel (%p245) target = $region16
      $region15: #{multi_task_loss.1} parent=11 // pred_region
        _
      $region16: #{multi_task_loss.1} parent=11 // pred_fallthru
        _
    $region12: #{multi_task_loss.1} parent=5 // pred_fallthru
      _
    %p248 = scmp.lt.s32.totalorder %s12, 2
    // Predicated region
    $region17: #{multi_task_loss.1} parent=5 // pred_check
      %p249 = pneg %p248
    $region18: #{multi_task_loss.1} parent=5 // pred_check_branch
      %251 = sbr.rel (%p249) target = $region20
    $region19: #{multi_task_loss.1} parent=5 // pred_region
      // Predicated region
      $region21: #{multi_task_loss.1} parent=19 // pred_check
        %p252 = pneg %p55
      $region22: #{multi_task_loss.1} parent=19 // pred_check_branch
        %254 = sbr.rel (%p252) target = $region24
      $region23: #{multi_task_loss.1} parent=19 // pred_region
        %s255 = sadd.s32 %s20, %s21
        %s256 = smul.u32 2, %s255
        %p257 = scmp.lt.s32.totalorder %s19, 1
        %s258 = scalar_select %p257, %s19, 1
        %p259 = scmp.lt.s32.totalorder %s256, 1
        %s260 = scalar_select %p259, %s256, 1
        %s261 = smul.addr %s258, 2
        %s262 = sadd.s32 %s260, %s261
        %s263 = smul.addr %s262, 8
        %s264 = scalar_lea.vmem %s0, %s263
        %s265 = sadd.s32 %s20, %s21
        %s266 = smul.u32 2, %s265
      $region24: #{multi_task_loss.1} parent=19 // pred_fallthru
        _
      // Predicated region
      $region25: #{multi_task_loss.1} parent=19 // pred_check
        %p267 = pneg %p85
      $region26: #{multi_task_loss.1} parent=19 // pred_check_branch
        %269 = sbr.rel (%p267) target = $region28
      $region27: #{multi_task_loss.1} parent=19 // pred_region
        %s270 = sadd.s32 %s20, %s21
        %s271 = smul.u32 2, %s270
        %p272 = scmp.lt.s32.totalorder %s19, 1
        %s273 = scalar_select %p272, %s19, 1
        %p274 = scmp.lt.s32.totalorder %s271, 1
        %s275 = scalar_select %p274, %s271, 1
        %s276 = smul.addr %s273, 2
        %s277 = sadd.s32 %s275, %s276
        %s278 = smul.addr %s277, 8
        %s279 = scalar_lea.vmem %s1, %s278
        %s280 = sadd.s32 %s20, %s21
        %s281 = smul.u32 2, %s280
      $region28: #{multi_task_loss.1} parent=19 // pred_fallthru
        _
      // Predicated region
      $region29: #{multi_task_loss.1} parent=19 // pred_check
        %p282 = pneg %p115
      $region30: #{multi_task_loss.1} parent=19 // pred_check_branch
        %284 = sbr.rel (%p282) target = $region32
      $region31: #{multi_task_loss.1} parent=19 // pred_region
        %s285 = sadd.s32 %s20, %s21
        %s286 = smul.u32 2, %s285
        %p287 = scmp.lt.s32.totalorder %s19, 1
        %s288 = scalar_select %p287, %s19, 1
        %p289 = scmp.lt.s32.totalorder %s286, 1
        %s290 = scalar_select %p289, %s286, 1
        %s291 = smul.addr %s288, 2
        %s292 = sadd.s32 %s290, %s291
        %s293 = smul.addr %s292, 8
        %s294 = scalar_lea.vmem %s2, %s293
        %s295 = sadd.s32 %s20, %s21
        %s296 = smul.u32 2, %s295
      $region32: #{multi_task_loss.1} parent=19 // pred_fallthru
        _
      // Predicated region
      $region33: #{multi_task_loss.1} parent=19 // pred_check
        %p297 = pneg %p145
      $region34: #{multi_task_loss.1} parent=19 // pred_check_branch
        %299 = sbr.rel (%p297) target = $region36
      $region35: #{multi_task_loss.1} parent=19 // pred_region
        %s300 = sadd.s32 %s20, %s21
        %s301 = smul.u32 2, %s300
        %p302 = scmp.lt.s32.totalorder %s19, 1
        %s303 = scalar_select %p302, %s19, 1
        %p304 = scmp.lt.s32.totalorder %s301, 1
        %s305 = scalar_select %p304, %s301, 1
        %s306 = smul.addr %s303, 8
        %s307 = sadd.s32 %s305, %s306
        %s308 = smul.addr %s307, 8
        %s309 = scalar_lea.vmem %s3, %s308
        %s310 = sadd.s32 %s20, %s21
        %s311 = smul.u32 2, %s310
      $region36: #{multi_task_loss.1} parent=19 // pred_fallthru
        _
      // Predicated region
      $region37: #{multi_task_loss.1} parent=19 // pred_check
        %p312 = pneg %p175
      $region38: #{multi_task_loss.1} parent=19 // pred_check_branch
        %314 = sbr.rel (%p312) target = $region40
      $region39: #{multi_task_loss.1} parent=19 // pred_region
        %s315 = sadd.s32 %s20, %s21
        %s316 = smul.u32 2, %s315
        %p317 = scmp.lt.s32.totalorder %s19, 1
        %s318 = scalar_select %p317, %s19, 1
        %p319 = scmp.lt.s32.totalorder %s316, 1
        %s320 = scalar_select %p319, %s316, 1
        %s321 = smul.addr %s318, 2
        %s322 = sadd.s32 %s320, %s321
        %s323 = scalar_lea.vmem %s4, %s322
        %s324 = sadd.s32 %s20, %s21
        %s325 = smul.u32 2, %s324
      $region40: #{multi_task_loss.1} parent=19 // pred_fallthru
        _
    $region20: #{multi_task_loss.1} parent=5 // pred_fallthru
      _
    %p326 = scmp.le.s32.totalorder 1, %s12
    %p327 = scmp.lt.s32.totalorder %s12, 3
    %p328 = pnand %p326, %p327
    %p329 = pneg %p328
    // Predicated region
    $region41: #{multi_task_loss.1} parent=5 // pred_check
      _
    $region42: #{multi_task_loss.1} parent=5 // pred_check_branch
      %331 = sbr.rel (%p328) target = $region44
    $region43: #{multi_task_loss.1} parent=5 // pred_region
      %s332 = ssub.s32 %s12, 1
      %s333 = sadd.s32 %s23, %s24
      %s334 = smul.u32 2, %s333
      %p335 = scmp.lt.s32.totalorder %s22, 1
      %s336 = scalar_select %p335, %s22, 1
      %p337 = scmp.lt.s32.totalorder %s334, 1
      %s338 = scalar_select %p337, %s334, 1
      %s339 = smul.addr %s336, 2
      %s340 = sadd.s32 %s338, %s339
      %s341 = smul.addr %s340, 8
      %s342 = scalar_lea.vmem %s0, %s341
      %p343 = pneg %p61
      %p344 = pneg %p58
      %s345 = sadd.s32 %s23, %s24
      %s346 = smul.u32 2, %s345
      %p347 = scmp.lt.s32.totalorder %s22, 1
      %s348 = scalar_select %p347, %s22, 1
      %p349 = scmp.lt.s32.totalorder %s346, 1
      %s350 = scalar_select %p349, %s346, 1
      %s351 = smul.addr %s348, 2
      %s352 = sadd.s32 %s350, %s351
      %s353 = smul.addr %s352, 8
      %s354 = scalar_lea.vmem %s1, %s353
      %p355 = pneg %p91
      %p356 = pneg %p88
      %s357 = sadd.s32 %s23, %s24
      %s358 = smul.u32 2, %s357
      %p359 = scmp.lt.s32.totalorder %s22, 1
      %s360 = scalar_select %p359, %s22, 1
      %p361 = scmp.lt.s32.totalorder %s358, 1
      %s362 = scalar_select %p361, %s358, 1
      %s363 = smul.addr %s360, 2
      %s364 = sadd.s32 %s362, %s363
      %s365 = smul.addr %s364, 8
      %s366 = scalar_lea.vmem %s2, %s365
      %p367 = pneg %p121
      %p368 = pneg %p118
      %s369 = sadd.s32 %s23, %s24
      %s370 = smul.u32 2, %s369
      %p371 = scmp.lt.s32.totalorder %s22, 1
      %s372 = scalar_select %p371, %s22, 1
      %p373 = scmp.lt.s32.totalorder %s370, 1
      %s374 = scalar_select %p373, %s370, 1
      %s375 = smul.addr %s372, 8
      %s376 = sadd.s32 %s374, %s375
      %s377 = smul.addr %s376, 8
      %s378 = scalar_lea.vmem %s3, %s377
      %p379 = pneg %p151
      %p380 = pneg %p148
      %s381 = sadd.s32 %s23, %s24
      %s382 = smul.u32 2, %s381
      %p383 = scmp.lt.s32.totalorder %s22, 1
      %s384 = scalar_select %p383, %s22, 1
      %p385 = scmp.lt.s32.totalorder %s382, 1
      %s386 = scalar_select %p385, %s382, 1
      %s387 = smul.addr %s384, 2
      %s388 = sadd.s32 %s386, %s387
      %s389 = scalar_lea.vmem %s4, %s388
      %p390 = pneg %p181
      %p391 = pneg %p178
      %p392 = pneg %p202
      %p393 = pneg %p199
      %p394 = pneg %p230
      %p395 = pneg %p227
      %p396 = scmp.lt.s32.totalorder %s22, 1
      %s397 = scalar_select %p396, %s22, 1
      %p398 = scmp.lt.s32.totalorder %s23, 0
      %s399 = scalar_select %p398, %s23, 0
      %s400 = sadd.s32 %s399, %s397
      %s401 = smul.addr %s400, 8
      %s402 = scalar_lea.vmem %s6, %s401
      %s403 = sadd.s32 %s23, %s24
      %s404 = smul.u32 2, %s403
      %p405 = scmp.lt.s32.totalorder %s22, 1
      %s406 = scalar_select %p405, %s22, 1
      %p407 = scmp.lt.s32.totalorder %s404, 1
      %s408 = scalar_select %p407, %s404, 1
      %s409 = smul.addr %s406, 2
      %s410 = sadd.s32 %s408, %s409
      %s411 = smul.addr %s410, 8
      %s412 = scalar_lea.vmem %s0, %s411
      %s413 = sadd.s32 %s23, %s24
      %s414 = smul.u32 2, %s413
      %s415 = sadd.s32 %s23, %s24
      %s416 = smul.u32 2, %s415
      %p417 = scmp.lt.s32.totalorder %s22, 1
      %s418 = scalar_select %p417, %s22, 1
      %p419 = scmp.lt.s32.totalorder %s416, 1
      %s420 = scalar_select %p419, %s416, 1
      %s421 = smul.addr %s418, 2
      %s422 = sadd.s32 %s420, %s421
      %s423 = smul.addr %s422, 8
      %s424 = scalar_lea.vmem %s1, %s423
      %s425 = sadd.s32 %s23, %s24
      %s426 = smul.u32 2, %s425
      %s427 = sadd.s32 %s23, %s24
      %s428 = smul.u32 2, %s427
      %p429 = scmp.lt.s32.totalorder %s22, 1
      %s430 = scalar_select %p429, %s22, 1
      %p431 = scmp.lt.s32.totalorder %s428, 1
      %s432 = scalar_select %p431, %s428, 1
      %s433 = smul.addr %s430, 2
      %s434 = sadd.s32 %s432, %s433
      %s435 = smul.addr %s434, 8
      %s436 = scalar_lea.vmem %s2, %s435
      %s437 = sadd.s32 %s23, %s24
      %s438 = smul.u32 2, %s437
      %s439 = sadd.s32 %s23, %s24
      %s440 = smul.u32 2, %s439
      %p441 = scmp.lt.s32.totalorder %s22, 1
      %s442 = scalar_select %p441, %s22, 1
      %p443 = scmp.lt.s32.totalorder %s440, 1
      %s444 = scalar_select %p443, %s440, 1
      %s445 = smul.addr %s442, 8
      %s446 = sadd.s32 %s444, %s445
      %s447 = smul.addr %s446, 8
      %s448 = scalar_lea.vmem %s3, %s447
      %s449 = sadd.s32 %s23, %s24
      %s450 = smul.u32 2, %s449
      %s451 = sadd.s32 %s23, %s24
      %s452 = smul.u32 2, %s451
      %p453 = scmp.lt.s32.totalorder %s22, 1
      %s454 = scalar_select %p453, %s22, 1
      %p455 = scmp.lt.s32.totalorder %s452, 1
      %s456 = scalar_select %p455, %s452, 1
      %s457 = smul.addr %s454, 2
      %s458 = sadd.s32 %s456, %s457
      %s459 = scalar_lea.vmem %s4, %s458
      %s460 = sadd.s32 %s23, %s24
      %s461 = smul.u32 2, %s460
      %p462 = scmp.lt.s32.totalorder %s22, 1
      %s463 = scalar_select %p462, %s22, 1
      %p464 = scmp.lt.s32.totalorder %s23, 0
      %s465 = scalar_select %p464, %s23, 0
      %s466 = sadd.s32 %s465, %s463
      %s467 = smul.addr %s466, 8
      %s468 = scalar_lea.vmem %s6, %s467
      %p469 = scmp.eq.s32.totalorder %s24, 0
      // Predicated region
      $region45: #{multi_task_loss.1} parent=43 // pred_check
        %p470 = pneg %p469
      $region46: #{multi_task_loss.1} parent=43 // pred_check_branch
        %472 = sbr.rel (%p470) target = $region48
      $region47: #{multi_task_loss.1} parent=43 // pred_region
        %473 = vst [vmem:[#allocation2] sm:$0xff] 0.0
        %474 = vst [vmem:[#allocation2 + $0x8] sm:$0xff] 0.0
        %475 = vst [vmem:[#allocation3] sm:$0xff] 0.0
        %476 = vst [vmem:[#allocation3 + $0x8] sm:$0xff] 0.0
        %v477 = vlaneseq
        %vm478 = vcmp.ge.s32.totalorder %v477, 0
        %vm479 = vcmp.lt.s32.totalorder %v477, 256
        %vm480 = vmand %vm478, %vm479
        %481 = vst.msk [vmem:[#allocation4] sm:$0x3] %vm480, 0.0
        %482 = vst.msk [vmem:[#allocation5] sm:$0x3] %vm480, 0.0
        %483 = vst.msk [vmem:[#allocation6] sm:$0x3] %vm480, 0.0
      $region48: #{multi_task_loss.1} parent=43 // pred_fallthru
        _
      %v484 = vld [vmem:[%s412] sm:$0xff]
      %v485 = vld [vmem:[%s412 + $0x8] sm:$0xff]
      %v486 = vld [vmem:[%s424] sm:$0xff]
      %v487 = vld [vmem:[%s424 + $0x8] sm:$0xff]
      %v488 = vld [vmem:[%s436] sm:$0xff]
      %v489 = vld [vmem:[%s436 + $0x8] sm:$0xff]
      %v490 = vsub.f32 %v484, %v486
      %v491 = vsub.f32 %v485, %v487
      %v492 = vmul.f32 %v490, %v490
      %v493 = vmul.f32 %v491, %v491
      %v494 = vmul.f32 %v492, %v488
      %v495 = vmul.f32 %v493, %v489
      %v496 = vld [vmem:[#allocation2] sm:$0xff]
      %v497 = vld [vmem:[#allocation2 + $0x8] sm:$0xff]
      %v498 = vadd.f32 %v496, %v494
      %v499 = vadd.f32 %v497, %v495
      %500 = vst [vmem:[#allocation2] sm:$0xff] %v498
      %501 = vst [vmem:[#allocation2 + $0x8] sm:$0xff] %v499
      %v502 = vld [vmem:[#allocation3] sm:$0xff]
      %v503 = vld [vmem:[#allocation3 + $0x8] sm:$0xff]
      %v504 = vadd.f32 %v502, %v488
      %v505 = vadd.f32 %v503, %v489
      %506 = vst [vmem:[#allocation3] sm:$0xff] %v504
      %507 = vst [vmem:[#allocation3 + $0x8] sm:$0xff] %v505
      %v508 = vld [vmem:[%s448] sm:$0xff]
      %v509 = vld [vmem:[%s448 + $0x8] sm:$0xff]
      %v510 = vld [vmem:[%s448 + $0x10] sm:$0xff]
      %v511 = vld [vmem:[%s448 + $0x18] sm:$0xff]
      %v512 = vld [vmem:[%s448 + $0x20] sm:$0xff]
      %v513 = vld [vmem:[%s448 + $0x28] sm:$0xff]
      %v514 = vld [vmem:[%s448 + $0x30] sm:$0x7f]
      %v515 = vld [vmem:[%s448 + $0x38] sm:$0x7f]
      %v516 = vld [vmem:[%s5] sm:$0xff]
      %v517 = vld [vmem:[%s5 + $0x8] sm:$0xff]
      %v518 = vld [vmem:[%s5 + $0x10] sm:$0xff]
      %v519 = vld [vmem:[%s5 + $0x18] sm:$0x7f]
      %v520 = vmax.f32 %v508, %v512
      %vm521 = vcmask 1046528
      %v522 = vsel %vm521, %v514, -inf
      %v523 = vmax.f32 %v510, %v522
      %v524 = vmax.f32 %v520, %v523
      %v525 = vrot.slane %v524, 4
      %v526 = vmax.f32 %v524, %v525
      %v527 = vrot.slane %v526, 2
      %v528 = vmax.f32 %v526, %v527
      %v529 = vrot.slane %v528, 1
      %v530 = vmax.f32 %v528, %v529
      %v531 = vmax.f32 %v509, %v513
      %v532 = vsel %vm521, %v515, -inf
      %v533 = vmax.f32 %v511, %v532
      %v534 = vmax.f32 %v531, %v533
      %v535 = vrot.slane %v534, 4
      %v536 = vmax.f32 %v534, %v535
      %v537 = vrot.slane %v536, 2
      %v538 = vmax.f32 %v536, %v537
      %v539 = vrot.slane %v538, 1
      %v540 = vmax.f32 %v538, %v539
      %v541 = vsub.f32 %v508, %v530
      %v542 = vsub.f32 %v509, %v540
      %v543 = vsub.f32 %v510, %v530
      %v544 = vsub.f32 %v511, %v540
      %v545 = vsub.f32 %v512, %v530
      %v546 = vsub.f32 %v513, %v540
      %v547 = vsub.f32 %v514, %v530
      %v548 = vsub.f32 %v515, %v540
      %v549 = vmul.f32 %v541, 1.442695
      %v550 = vpow.pop %v549
      %v551 = vmul.f32 %v542, 1.442695
      %v552 = vpow.pop %v551
      %v553 = vmul.f32 %v543, 1.442695
      %v554 = vpow.pop %v553
      %v555 = vmul.f32 %v544, 1.442695
      %v556 = vpow.pop %v555
      %v557 = vmul.f32 %v545, 1.442695
      %v558 = vpow.pop %v557
      %v559 = vmul.f32 %v546, 1.442695
      %v560 = vpow.pop %v559
      %v561 = vmul.f32 %v547, 1.442695
      %v562 = vpow.pop %v561
      %v563 = vmul.f32 %v548, 1.442695
      %v564 = vpow.pop %v563
      %v565 = vadd.f32 %v550, %v554
      %v566 = vadd.f32 %v565, %v558
      %v567 = vsel %vm521, %v562, 0.0
      %v568 = vadd.f32 %v566, %v567
      %v569 = vrot.slane %v568, 4
      %v570 = vadd.f32 %v568, %v569
      %v571 = vrot.slane %v570, 2
      %v572 = vadd.f32 %v570, %v571
      %v573 = vrot.slane %v572, 1
      %v574 = vadd.f32 %v572, %v573
      %v575 = vadd.f32 %v552, %v556
      %v576 = vadd.f32 %v575, %v560
      %v577 = vsel %vm521, %v564, 0.0
      %v578 = vadd.f32 %v576, %v577
      %v579 = vrot.slane %v578, 4
      %v580 = vadd.f32 %v578, %v579
      %v581 = vrot.slane %v580, 2
      %v582 = vadd.f32 %v580, %v581
      %v583 = vrot.slane %v582, 1
      %v584 = vadd.f32 %v582, %v583
      %v585 = vlog2.pop %v574
      %v586 = vmul.f32 %v585, 0.6931472
      %v587 = vlog2.pop %v584
      %v588 = vmul.f32 %v587, 0.6931472
      %v589 = vld [vmem:[%s459] sm:$0x3]
      %v590 = vlaneseq
      %v591 = vshrl.u32 %v590, 7
      %v592 = vadd.s32 %v591, 8
      %v593 = vadd.s32 %v591, 16
      %v594 = vadd.s32 %v591, 24
      %v595 = vlaneseq
      %v596 = vshrl.u32 %v595, 7
      %v597 = vsub.s32 0, %v596
      %v598 = vrot.slane %v589, %v597
      %v599 = vlaneseq
      %v600 = vshrl.u32 %v599, 7
      %v601 = vsub.s32 1, %v600
      %v602 = vrot.slane %v589, %v601
      %vm603 = vcmp.eq.s32.totalorder %v591, %v598
      %vm604 = vcmp.eq.s32.totalorder %v591, %v602
      %vm605 = vcmp.eq.s32.totalorder %v592, %v598
      %vm606 = vcmp.eq.s32.totalorder %v592, %v602
      %vm607 = vcmp.eq.s32.totalorder %v593, %v598
      %vm608 = vcmp.eq.s32.totalorder %v593, %v602
      %vm609 = vcmp.eq.s32.totalorder %v594, %v598
      %vm610 = vcmp.eq.s32.totalorder %v594, %v602
      %v611 = vsel %vm603, %v541, 0.0
      %v612 = vsel %vm604, %v542, 0.0
      %v613 = vsel %vm605, %v543, 0.0
      %v614 = vsel %vm606, %v544, 0.0
      %v615 = vsel %vm607, %v545, 0.0
      %v616 = vsel %vm608, %v546, 0.0
      %v617 = vsel %vm609, %v547, 0.0
      %v618 = vsel %vm610, %v548, 0.0
      %v619 = vadd.f32 %v611, %v613
      %v620 = vadd.f32 %v619, %v615
      %v621 = vsel %vm521, %v617, 0.0
      %v622 = vadd.f32 %v620, %v621
      %v623 = vrot.slane %v622, 4
      %v624 = vadd.f32 %v622, %v623
      %v625 = vrot.slane %v624, 2
      %v626 = vadd.f32 %v624, %v625
      %v627 = vrot.slane %v626, 1
      %v628 = vadd.f32 %v626, %v627
      %v629 = vadd.f32 %v612, %v614
      %v630 = vadd.f32 %v629, %v616
      %v631 = vsel %vm521, %v618, 0.0
      %v632 = vadd.f32 %v630, %v631
      %v633 = vrot.slane %v632, 4
      %v634 = vadd.f32 %v632, %v633
      %v635 = vrot.slane %v634, 2
      %v636 = vadd.f32 %v634, %v635
      %v637 = vrot.slane %v636, 1
      %v638 = vadd.f32 %v636, %v637
      %640 = vset.pattern.permute.xlu0 0
      %641 = vperm.xlu0 %640, %v516
      %v642 = vpop.permute.xlu0 %641
      %645 = vset.pattern.permute.xlu0 0
      %646 = vperm.xlu0 %645, %v517
      %v647 = vpop.permute.xlu0 %646
      %650 = vset.pattern.permute.xlu0 0
      %651 = vperm.xlu0 %650, %v518
      %v652 = vpop.permute.xlu0 %651
      %655 = vset.pattern.permute.xlu0 0
      %656 = vperm.xlu0 %655, %v519
      %v657 = vpop.permute.xlu0 %656
      %v659 = vsel %vm603, %v642, 0.0
      %v660 = vsel %vm604, %v642, 0.0
      %v661 = vsel %vm605, %v647, 0.0
      %v662 = vsel %vm606, %v647, 0.0
      %v663 = vsel %vm607, %v652, 0.0
      %v664 = vsel %vm608, %v652, 0.0
      %v665 = vsel %vm609, %v657, 0.0
      %v666 = vsel %vm610, %v657, 0.0
      %v667 = vadd.f32 %v659, %v661
      %v668 = vadd.f32 %v667, %v663
      %v669 = vsel %vm521, %v665, 0.0
      %v670 = vadd.f32 %v668, %v669
      %v671 = vrot.slane %v670, 4
      %v672 = vadd.f32 %v670, %v671
      %v673 = vrot.slane %v672, 2
      %v674 = vadd.f32 %v672, %v673
      %v675 = vrot.slane %v674, 1
      %v676 = vadd.f32 %v674, %v675
      %v677 = vadd.f32 %v660, %v662
      %v678 = vadd.f32 %v677, %v664
      %v679 = vsel %vm521, %v666, 0.0
      %v680 = vadd.f32 %v678, %v679
      %v681 = vrot.slane %v680, 4
      %v682 = vadd.f32 %v680, %v681
      %v683 = vrot.slane %v682, 2
      %v684 = vadd.f32 %v682, %v683
      %v685 = vrot.slane %v684, 1
      %v686 = vadd.f32 %v684, %v685
      %v687 = vmul.f32 %v642, %v541
      %v688 = vmul.f32 %v642, %v542
      %v689 = vmul.f32 %v647, %v543
      %v690 = vmul.f32 %v647, %v544
      %v691 = vmul.f32 %v652, %v545
      %v692 = vmul.f32 %v652, %v546
      %v693 = vmul.f32 %v657, %v547
      %v694 = vmul.f32 %v657, %v548
      %v695 = vadd.f32 %v687, %v689
      %v696 = vadd.f32 %v695, %v691
      %v697 = vsel %vm521, %v693, 0.0
      %v698 = vadd.f32 %v696, %v697
      %v699 = vrot.slane %v698, 4
      %v700 = vadd.f32 %v698, %v699
      %v701 = vrot.slane %v700, 2
      %v702 = vadd.f32 %v700, %v701
      %v703 = vrot.slane %v702, 1
      %v704 = vadd.f32 %v702, %v703
      %v705 = vadd.f32 %v688, %v690
      %v706 = vadd.f32 %v705, %v692
      %v707 = vsel %vm521, %v694, 0.0
      %v708 = vadd.f32 %v706, %v707
      %v709 = vrot.slane %v708, 4
      %v710 = vadd.f32 %v708, %v709
      %v711 = vrot.slane %v710, 2
      %v712 = vadd.f32 %v710, %v711
      %v713 = vrot.slane %v712, 1
      %v714 = vadd.f32 %v712, %v713
      %vm715 = vcmask 7168
      %v716 = vsel %vm715, %v516, 0.0
      %v717 = vsel %vm715, %v517, 0.0
      %v718 = vadd.f32 %v716, %v717
      %v719 = vsel %vm715, %v518, 0.0
      %v720 = vadd.f32 %v718, %v719
      %vm721 = vcmask 6144
      %v722 = vsel %vm721, %v519, 0.0
      %v723 = vadd.f32 %v720, %v722
      %724 = vadd.xlane.f32.xlu0 %v723
      %v725 = vpop.xlane.xlu0 %724
      %v726 = vrot.slane %v725, 4
      %v727 = vadd.f32 %v725, %v726
      %v728 = vrot.slane %v727, 2
      %v729 = vadd.f32 %v727, %v728
      %v730 = vrot.slane %v729, 1
      %v731 = vadd.f32 %v729, %v730
      %s732 = vtos %v731
      %v733 = vsub.f32 %v586, %v628
      %v734 = vsub.f32 %v588, %v638
      %v735 = vmul.f32 %v676, %v733
      %v736 = vmul.f32 %v686, %v734
      %v737 = vstv %s732
      %v738 = vmul.f32 %v737, %v586
      %v739 = vmul.f32 %v737, %v588
      %v740 = vsub.f32 %v738, %v704
      %v741 = vsub.f32 %v739, %v714
      %v742 = vld [vmem:[#allocation4] sm:$0x3]
      %v745 = vcombine.low %v735, %v736
      %v747 = vunpack.c.l.s4 1966171168
      %v748 = vunpack.c.0.s8 %v747
      %v749 = vlaneseq
      %v750 = vshrl.u32 %v749, 7
      %v751 = vsub.s32 %v748, %v750
      %v752 = vrot.slane %v745, %v751
      %v754 = vunpack.c.l.s4 1966171168
      %v755 = vunpack.c.0.s8 %v754
      %v756 = vlaneseq
      %v757 = vshrl.u32 %v756, 7
      %v758 = vsub.s32 %v755, %v757
      %v759 = vrot.slane %v752, %v758
      %v761 = vadd.f32 %v742, %v759
      %v762 = vlaneseq
      %vm763 = vcmp.ge.s32.totalorder %v762, 0
      %vm764 = vcmp.lt.s32.totalorder %v762, 256
      %vm765 = vmand %vm763, %vm764
      %766 = vst.msk [vmem:[#allocation4] sm:$0x3] %vm765, %v761
      %v767 = vld [vmem:[#allocation5] sm:$0x3]
      %v770 = vcombine.low %v740, %v741
      %v772 = vunpack.c.l.s4 1966171168
      %v773 = vunpack.c.0.s8 %v772
      %v774 = vlaneseq
      %v775 = vshrl.u32 %v774, 7
      %v776 = vsub.s32 %v773, %v775
      %v777 = vrot.slane %v770, %v776
      %v779 = vunpack.c.l.s4 1966171168
      %v780 = vunpack.c.0.s8 %v779
      %v781 = vlaneseq
      %v782 = vshrl.u32 %v781, 7
      %v783 = vsub.s32 %v780, %v782
      %v784 = vrot.slane %v777, %v783
      %v786 = vadd.f32 %v767, %v784
      %787 = vst.msk [vmem:[#allocation5] sm:$0x3] %vm765, %v786
      %v788 = vld [vmem:[#allocation6] sm:$0x3]
      %v791 = vcombine.low %v676, %v686
      %v793 = vunpack.c.l.s4 1966171168
      %v794 = vunpack.c.0.s8 %v793
      %v795 = vlaneseq
      %v796 = vshrl.u32 %v795, 7
      %v797 = vsub.s32 %v794, %v796
      %v798 = vrot.slane %v791, %v797
      %v800 = vunpack.c.l.s4 1966171168
      %v801 = vunpack.c.0.s8 %v800
      %v802 = vlaneseq
      %v803 = vshrl.u32 %v802, 7
      %v804 = vsub.s32 %v801, %v803
      %v805 = vrot.slane %v798, %v804
      %v807 = vadd.f32 %v788, %v805
      %808 = vst.msk [vmem:[#allocation6] sm:$0x3] %vm765, %v807
      // Predicated region
      $region49: #{multi_task_loss.1} parent=43 // pred_check
        %p809 = pneg %p469
      $region50: #{multi_task_loss.1} parent=43 // pred_check_branch
        %811 = sbr.rel (%p809) target = $region52
      $region51: #{multi_task_loss.1} parent=43 // pred_region
        %v812 = vld [vmem:[#allocation2] sm:$0xff]
        %v813 = vld [vmem:[#allocation2 + $0x8] sm:$0xff]
        %v814 = vadd.f32 %v812, %v813
        %815 = vadd.xlane.f32.xlu0 %v814
        %v816 = vpop.xlane.xlu0 %815
        %v817 = vrot.slane %v816, 4
        %v818 = vadd.f32 %v816, %v817
        %v819 = vrot.slane %v818, 2
        %v820 = vadd.f32 %v818, %v819
        %v821 = vrot.slane %v820, 1
        %v822 = vadd.f32 %v820, %v821
        %s823 = vtos %v822
        %v824 = vld [vmem:[#allocation3] sm:$0xff]
        %v825 = vld [vmem:[#allocation3 + $0x8] sm:$0xff]
        %v826 = vadd.f32 %v824, %v825
        %827 = vadd.xlane.f32.xlu0 %v826
        %v828 = vpop.xlane.xlu0 %827
        %v829 = vrot.slane %v828, 4
        %v830 = vadd.f32 %v828, %v829
        %v831 = vrot.slane %v830, 2
        %v832 = vadd.f32 %v830, %v831
        %v833 = vrot.slane %v832, 1
        %v834 = vadd.f32 %v832, %v833
        %s835 = vtos %v834
        %v836 = vld [vmem:[#allocation4] sm:$0x3]
        %v838 = vlaneseq
        %v839 = vshrl.u32 %v838, 7
        %v840 = vsub.s32 0, %v839
        %v841 = vrot.slane %v836, %v840
        %v842 = vlaneseq
        %v843 = vshrl.u32 %v842, 7
        %v844 = vsub.s32 1, %v843
        %v845 = vrot.slane %v836, %v844
        %vm848 = vcmask 1040384
        %v849 = vsel %vm848, %v841, 0.0
        %v850 = vsel %vm848, %v845, 0.0
        %v851 = vadd.f32 %v849, %v850
        %852 = vadd.xlane.f32.xlu0 %v851
        %v853 = vpop.xlane.xlu0 %852
        %v854 = vrot.slane %v853, 4
        %v855 = vadd.f32 %v853, %v854
        %v856 = vrot.slane %v855, 2
        %v857 = vadd.f32 %v855, %v856
        %v858 = vrot.slane %v857, 1
        %v859 = vadd.f32 %v857, %v858
        %s860 = vtos %v859
        %v861 = vld [vmem:[#allocation5] sm:$0x3]
        %v863 = vlaneseq
        %v864 = vshrl.u32 %v863, 7
        %v865 = vsub.s32 0, %v864
        %v866 = vrot.slane %v861, %v865
        %v867 = vlaneseq
        %v868 = vshrl.u32 %v867, 7
        %v869 = vsub.s32 1, %v868
        %v870 = vrot.slane %v861, %v869
        %v873 = vsel %vm848, %v866, 0.0
        %v874 = vsel %vm848, %v870, 0.0
        %v875 = vadd.f32 %v873, %v874
        %876 = vadd.xlane.f32.xlu0 %v875
        %v877 = vpop.xlane.xlu0 %876
        %v878 = vrot.slane %v877, 4
        %v879 = vadd.f32 %v877, %v878
        %v880 = vrot.slane %v879, 2
        %v881 = vadd.f32 %v879, %v880
        %v882 = vrot.slane %v881, 1
        %v883 = vadd.f32 %v881, %v882
        %s884 = vtos %v883
        %v885 = vld [vmem:[#allocation6] sm:$0x3]
        %v887 = vlaneseq
        %v888 = vshrl.u32 %v887, 7
        %v889 = vsub.s32 0, %v888
        %v890 = vrot.slane %v885, %v889
        %v891 = vlaneseq
        %v892 = vshrl.u32 %v891, 7
        %v893 = vsub.s32 1, %v892
        %v894 = vrot.slane %v885, %v893
        %v897 = vsel %vm848, %v890, 0.0
        %v898 = vsel %vm848, %v894, 0.0
        %v899 = vadd.f32 %v897, %v898
        %900 = vadd.xlane.f32.xlu0 %v899
        %v901 = vpop.xlane.xlu0 %900
        %v902 = vrot.slane %v901, 4
        %v903 = vadd.f32 %v901, %v902
        %v904 = vrot.slane %v903, 2
        %v905 = vadd.f32 %v903, %v904
        %v906 = vrot.slane %v905, 1
        %v907 = vadd.f32 %v905, %v906
        %s908 = vtos %v907
        %vm909 = vcmp.eq.s32.totalorder %v591, 0
        %v910 = vstv %s823
        %v911 = vsel %vm909, %v910, 0.0
        %vm912 = vcmp.eq.s32.totalorder %v591, 1
        %v913 = vstv %s835
        %v914 = vsel %vm912, %v913, 0.0
        %v915 = vadd.f32 %v911, %v914
        %vm916 = vcmp.eq.s32.totalorder %v591, 2
        %v917 = vstv %s860
        %v918 = vsel %vm916, %v917, 0.0
        %v919 = vadd.f32 %v915, %v918
        %vm920 = vcmp.eq.s32.totalorder %v591, 3
        %v921 = vstv %s884
        %v922 = vsel %vm920, %v921, 0.0
        %v923 = vadd.f32 %v919, %v922
        %vm924 = vcmp.eq.s32.totalorder %v591, 4
        %v925 = vstv %s908
        %v926 = vsel %vm924, %v925, 0.0
        %v927 = vadd.f32 %v923, %v926
        %928 = vst [vmem:[%s468] sm:$0xff] %v927
      $region52: #{multi_task_loss.1} parent=43 // pred_fallthru
        _
      %p929 = scmp.lt.s32.totalorder %s22, 1
      %s930 = scalar_select %p929, %s22, 1
      %p931 = scmp.lt.s32.totalorder %s23, 0
      %s932 = scalar_select %p931, %s23, 0
      %s933 = sadd.s32 %s932, %s930
      %s934 = smul.addr %s933, 8
      %s935 = scalar_lea.vmem %s6, %s934
      // Predicated region
      $region53: #{multi_task_loss.1} parent=43 // pred_check
        %p936 = pneg %p227
      $region54: #{multi_task_loss.1} parent=43 // pred_check_branch
        %938 = sbr.rel (%p936) target = $region56
      $region55: #{multi_task_loss.1} parent=43 // pred_region
        _
      $region56: #{multi_task_loss.1} parent=43 // pred_fallthru
        _
    $region44: #{multi_task_loss.1} parent=5 // pred_fallthru
      _
    %p939 = scmp.le.s32.totalorder 2, %s12
    // Predicated region
    $region57: #{multi_task_loss.1} parent=5 // pred_check
      %p940 = pneg %p939
    $region58: #{multi_task_loss.1} parent=5 // pred_check_branch
      %942 = sbr.rel (%p940) target = $region60
    $region59: #{multi_task_loss.1} parent=5 // pred_region
      %s943 = ssub.s32 %s12, 2
      // Predicated region
      $region61: #{multi_task_loss.1} parent=59 // pred_check
        %p944 = pneg %p233
      $region62: #{multi_task_loss.1} parent=59 // pred_check_branch
        %946 = sbr.rel (%p944) target = $region64
      $region63: #{multi_task_loss.1} parent=59 // pred_region
        %p947 = scmp.lt.s32.totalorder %s25, 1
        %s948 = scalar_select %p947, %s25, 1
        %p949 = scmp.lt.s32.totalorder %s26, 0
        %s950 = scalar_select %p949, %s26, 0
        %s951 = sadd.s32 %s950, %s948
        %s952 = smul.addr %s951, 8
        %s953 = scalar_lea.vmem %s6, %s952
      $region64: #{multi_task_loss.1} parent=59 // pred_fallthru
        _
    $region60: #{multi_task_loss.1} parent=5 // pred_fallthru
      _
  $region6: #{multi_task_loss.1} parent=0 // loop_footer
    %s16 = sadd.s32 1, %s12
  $region7: #{multi_task_loss.1} parent=0 // loop_footer_branch
    %11 = sbr.rel target = $region3
  $region8: #{multi_task_loss.1} parent=0 // loop_exit
    _

</llo_original>
